<compile_context>
chip_gen: v7x
topology: tpu7x:2x2x1
jax: 0.10.0
libtpu: 0.0.40
codegen_flags: <defaults>
</compile_context>

<pallas_src>
import jax
import jax.numpy as jnp
from jax.experimental import pallas as pl
from jax.experimental.pallas import tpu as pltpu

# ---- small, module-consistent shapes (lane-aligned on purpose) ---------------
B, S, D, H = 2, 8, 128, 128   # batch, seq_len, emb_dim, hidden


def _as_batch_vec(v, b):
    """Normalize a scalar / (b,1,1) value to a (b,) f32 vector (static-shape logic only)."""
    v = jnp.asarray(v, jnp.float32).reshape(-1)
    if v.shape[0] == 1:
        v = jnp.broadcast_to(v, (b,))
    return v


def _vmem_spec():
    return pl.BlockSpec(memory_space=pltpu.MemorySpace.VMEM)


# ==============================================================================
# Kernels — one program, whole batch per block.
# ==============================================================================
def _make_cfg_kernel(rows, d):
    """rows = B*S original rows.  Kernel stacks [uncond ; cond] -> 2*rows LHS rows."""

    def kernel(feat_ref, t_ref, keep_sp_ref, c_cond_ref, c_uncond_ref,
               w1_ref, wtime_ref, b1_ref, w2_ref, b2_ref, o_ref):
        feat = feat_ref[...]                                    # (rows, 3D) bf16 = [xt | text | speech]
        k = feat.shape[-1]

        # Uncond half = feat * lane-mask: x lanes -> 1, text lanes -> 0,
        # speech lanes -> keep_sp (1.0 iff t <= 0.5), per row.
        lane = jax.lax.broadcasted_iota(jnp.int32, (1, k), 1)
        keep_sp = keep_sp_ref[...]                              # (rows, 1) f32
        umask = jnp.where(lane < d, 1.0,
                          jnp.where(lane < 2 * d, 0.0, keep_sp))          # (rows, 3D) of {0,1}
        inp = jnp.concatenate([feat * umask.astype(jnp.bfloat16), feat],
                              axis=0)                                      # (2*rows, 3D) bf16

        # Single fused K = 3D matmul for both CFG halves of the whole batch.
        pre = jnp.dot(inp, w1_ref[...], preferred_element_type=jnp.float32)   # (2*rows, H) f32
        t_all = jnp.concatenate([t_ref[...], t_ref[...]], axis=0)             # (2*rows, 1) f32
        pre = pre + (t_all * wtime_ref[...] + b1_ref[...])     # bias + time in one add
        h = pre * jax.nn.sigmoid(pre)                          # SiLU in f32 (v5e: no bf16 VPU/EUP)

        out = jnp.dot(h.astype(jnp.bfloat16), w2_ref[...],
                      preferred_element_type=jnp.float32) + b2_ref[...]        # (2*rows, D) f32

        un = out[:rows]
        co = out[rows:]
        # CFG + padding mask fused: c_cond = keep*(1+g), c_uncond = keep*g (built in wrapper).
        o_ref[...] = (c_cond_ref[...] * co - c_uncond_ref[...] * un).astype(o_ref.dtype)

    return kernel


def _plain_kernel(feat_ref, t_ref, keep_ref,
                  w1_ref, wtime_ref, b1_ref, w2_ref, b2_ref, o_ref):
    pre = jnp.dot(feat_ref[...], w1_ref[...], preferred_element_type=jnp.float32)
    pre = pre + (t_ref[...] * wtime_ref[...] + b1_ref[...])
    h = pre * jax.nn.sigmoid(pre)
    out = jnp.dot(h.astype(jnp.bfloat16), w2_ref[...],
                  preferred_element_type=jnp.float32) + b2_ref[...]
    o_ref[...] = (keep_ref[...] * out).astype(o_ref.dtype)


# ==============================================================================
# pallas_call wrappers
# ==============================================================================
def _cfg_decoder_pallas(params, feat, t_row, keep_sp_row, c_cond_row, c_uncond_row):
    """params: (w1 (3D,H) bf16, wtime (1,H) f32, b1 (1,H) f32, w2 (H,D) bf16, b2 (1,D) f32)."""
    w1, wtime, b1, w2, b2 = params
    rows, k = feat.shape
    d = w2.shape[1]
    return pl.pallas_call(
        _make_cfg_kernel(rows, k // 3),
        out_shape=jax.ShapeDtypeStruct((rows, d), jnp.float32),
        in_specs=[_vmem_spec()] * 10,
        out_specs=_vmem_spec(),
    )(feat, t_row, keep_sp_row, c_cond_row, c_uncond_row, w1, wtime, b1, w2, b2)


def _plain_decoder_pallas(params, feat, t_row, keep_row):
    w1, wtime, b1, w2, b2 = params
    rows, _ = feat.shape
    d = w2.shape[1]
    return pl.pallas_call(
        _plain_kernel,
        out_shape=jax.ShapeDtypeStruct((rows, d), jnp.float32),
        in_specs=[_vmem_spec()] * 8,
        out_specs=_vmem_spec(),
    )(feat, t_row, keep_row, w1, wtime, b1, w2, b2)


# ==============================================================================
# Synthetic inner model exposing `forward_fm_decoder` (+ fused-CFG variant)
# ==============================================================================
class SyntheticFMModel:
    def __init__(self, key):
        ks = jax.random.split(key, 7)
        wx = jax.random.normal(ks[0], (D, H), jnp.float32) * 0.1
        wt = jax.random.normal(ks[1], (D, H), jnp.float32) * 0.1
        ws = jax.random.normal(ks[2], (D, H), jnp.float32) * 0.1
        # Stack the three input projections into one (3D, H) MXU weight (bf16 for the MXU).
        self.w1 = jnp.concatenate([wx, wt, ws], axis=0).astype(jnp.bfloat16)
        self.b1 = jax.random.normal(ks[3], (1, H), jnp.float32) * 0.1
        self.wtime = jax.random.normal(ks[4], (1, H), jnp.float32) * 0.1
        self.w2 = (jax.random.normal(ks[5], (H, D), jnp.float32) * 0.1).astype(jnp.bfloat16)
        self.b2 = jax.random.normal(ks[6], (1, D), jnp.float32) * 0.1

    @property
    def params(self):
        return (self.w1, self.wtime, self.b1, self.w2, self.b2)

    @staticmethod
    def _pack(xt, text_condition, speech_condition):
        b, s, d = xt.shape
        feat = jnp.concatenate([xt, text_condition, speech_condition], axis=-1)
        return feat.astype(jnp.bfloat16).reshape(b * s, 3 * d)

    # ---- plain (no-CFG) decoder ----------------------------------------------
    def forward_fm_decoder(self, t, xt, text_condition, speech_condition,
                           padding_mask=None, guidance_scale=None, **kwargs):
        if padding_mask is None:
            padding_mask = jnp.zeros(xt.shape[:2], dtype=bool)
        b, s, d = xt.shape
        t_row = jnp.repeat(_as_batch_vec(t, b), s)[:, None]                       # (b*s, 1)
        keep_row = jnp.logical_not(padding_mask).astype(jnp.float32).reshape(b * s, 1)
        feat = self._pack(xt, text_condition, speech_condition)                   # (b*s, 3d)
        out = _plain_decoder_pallas(self.params, feat, t_row, keep_row)
        return out.reshape(b, s, d)

    # ---- decoder with classifier-free guidance fused into the kernel ----------
    def forward_fm_decoder_cfg(self, t_vec, keep_speech_uncond, guidance,
                               xt, text_condition, speech_condition, padding_mask):
        b, s, d = xt.shape
        t_row = jnp.repeat(t_vec, s)[:, None]                                     # (b*s, 1)
        keep_sp_row = jnp.repeat(keep_speech_uncond, s)[:, None]
        g_row = jnp.repeat(guidance, s)[:, None]
        keep_pad = jnp.logical_not(padding_mask).astype(jnp.float32).reshape(b * s, 1)
        c_cond = keep_pad * (1.0 + g_row)        # padding mask folded into CFG coefficients
        c_uncond = keep_pad * g_row
        feat = self._pack(xt, text_condition, speech_condition)
        out = _cfg_decoder_pallas(self.params, feat, t_row, keep_sp_row, c_cond, c_uncond)
        return out.reshape(b, s, d)

    # ---- pure-JAX reference (same bf16 quantization points) -------------------
    def reference(self, t, xt, text_condition, speech_condition, padding_mask):
        b = xt.shape[0]
        t_vec = _as_batch_vec(t, b)
        inp = jnp.concatenate([xt, text_condition, speech_condition],
                              axis=-1).astype(jnp.bfloat16)
        pre = jnp.einsum("bsk,kh->bsh", inp, self.w1,
                         preferred_element_type=jnp.float32)
        pre = pre + self.b1 + t_vec[:, None, None] * self.wtime
        h = pre * jax.nn.sigmoid(pre)
        out = jnp.einsum("bsh,hd->bsd", h.astype(jnp.bfloat16), self.w2,
                         preferred_element_type=jnp.float32) + self.b2
        return out * (1.0 - padding_mask.astype(jnp.float32))[:, :, None]


# ==============================================================================
# DiffusionModel wrapper (JAX port of the PyTorch module's forward) — jit-able.
# ==============================================================================
class DiffusionModel:
    def __init__(self, model, distill: bool = False, func_name: str = "forward_fm_decoder"):
        self.model = model
        self.distill = distill
        self.func_name = func_name
        self.model_func = getattr(model, func_name)
        self.model_cfg_func = getattr(model, func_name + "_cfg")

    def __call__(self, t, x, text_condition, speech_condition,
                 padding_mask=None, guidance_scale=0.0, **kwargs):
        if padding_mask is None:
            padding_mask = jnp.zeros(x.shape[:2], dtype=bool)

        if self.distill:
            # TODO(synk): a real distillation decoder consumes guidance_scale; the
            # synthetic model ignores it.
            return self.model_func(t=t, xt=x, text_condition=text_condition,
                                   speech_condition=speech_condition,
                                   padding_mask=padding_mask,
                                   guidance_scale=guidance_scale, **kwargs)

        # Static fast path only when guidance is a plain Python number (no host sync
        # on traced values, wrapper stays jit-able).  For array/traced guidance we
        # always take the CFG path — with g == 0 it reduces exactly to the plain
        # decoder output, so semantics are preserved.
        if isinstance(guidance_scale, (int, float)) and float(guidance_scale) == 0.0:
            return self.model_func(t=t, xt=x, text_condition=text_condition,
                                   speech_condition=speech_condition,
                                   padding_mask=padding_mask, **kwargs)

        # ---- classifier-free guidance, fused into ONE Pallas kernel ------------
        # Unified per-element rule (covers both scalar-t and batched-t branches of
        # the original module):
        #   uncond half: text = 0; speech = 0 if t > 0.5 else speech
        #   cond   half: text, speech unchanged
        #   guidance   : doubled where t <= 0.5
        b = x.shape[0]
        t_vec = _as_batch_vec(t, b)
        g_vec = _as_batch_vec(guidance_scale, b)
        small_t = t_vec <= 0.5
        keep_speech_uncond = small_t.astype(jnp.float32)
        g_eff = jnp.where(small_t, g_vec * 2.0, g_vec)
        return self.model_cfg_func(t_vec, keep_speech_uncond, g_eff,
                                   x, text_condition, speech_condition, padding_mask)


# ==============================================================================
if __name__ == "__main__":
    key = jax.random.PRNGKey(0)
    k_x, k_txt, k_sp, k_model = jax.random.split(key, 4)

    t = jnp.array([[[0.7]], [[0.3]]], dtype=jnp.float32)      # (B,1,1): one >0.5, one <=0.5
    x = jax.random.normal(k_x, (B, S, D), jnp.float32)
    text_condition = jax.random.normal(k_txt, (B, S, D), jnp.float32)
    speech_condition = jax.random.normal(k_sp, (B, S, D), jnp.float32)
    padding_mask = jnp.zeros((B, S), dtype=bool).at[:, S - 2:].set(True)
    guidance_scale = jnp.full((B, 1, 1), 1.0, dtype=jnp.float32)

    inner = SyntheticFMModel(k_model)
    diffusion = DiffusionModel(inner, distill=False)

    # The whole CFG wrapper is jit-able (no host-synchronizing branches).
    cfg_fn = jax.jit(lambda t_, x_, txt_, sp_, pm_, g_: diffusion(
        t_, x_, txt_, sp_, padding_mask=pm_, guidance_scale=g_))
    res = cfg_fn(t, x, text_condition, speech_condition, padding_mask, guidance_scale)
    jax.block_until_ready(res)
    assert res.shape == (B, S, D)

    # ---- pure-JAX reference of the same CFG path (sanity check) ---------------
    t_vec = t.reshape(-1)
    small_t = t_vec <= 0.5
    sp_uncond = jnp.where(small_t[:, None, None], speech_condition,
                          jnp.zeros_like(speech_condition))
    g_eff = jnp.where(small_t[:, None, None], guidance_scale * 2.0, guidance_scale)
    ref_cond = inner.reference(t, x, text_condition, speech_condition, padding_mask)
    ref_uncond = inner.reference(t, x, jnp.zeros_like(text_condition),
                                 sp_uncond, padding_mask)
    ref = (1.0 + g_eff) * ref_cond - g_eff * ref_uncond
    assert jnp.allclose(res, ref, atol=1e-2, rtol=1e-2), "CFG mismatch vs reference"

    # ---- guidance_scale == 0.0 (static) fast path: plain decoder --------------
    res0 = diffusion(t, x, text_condition, speech_condition,
                     padding_mask=padding_mask, guidance_scale=0.0)
    jax.block_until_ready(res0)
    ref0 = inner.reference(t, x, text_condition, speech_condition, padding_mask)
    assert res0.shape == (B, S, D)
    assert jnp.allclose(res0, ref0, atol=1e-2, rtol=1e-2), "no-CFG mismatch vs reference"

    print("KERNEL_OK")
</pallas_src>

<mosaic_0001>
module attributes {stable_mosaic.version = 11 : i64} {
  func.func @kernel(%arg0: memref<16x384xbf16, #tpu.memory_space<vmem>>, %arg1: memref<16x1xf32, #tpu.memory_space<vmem>>, %arg2: memref<16x1xf32, #tpu.memory_space<vmem>>, %arg3: memref<16x1xf32, #tpu.memory_space<vmem>>, %arg4: memref<16x1xf32, #tpu.memory_space<vmem>>, %arg5: memref<384x128xbf16, #tpu.memory_space<vmem>>, %arg6: memref<1x128xf32, #tpu.memory_space<vmem>>, %arg7: memref<1x128xf32, #tpu.memory_space<vmem>>, %arg8: memref<128x128xbf16, #tpu.memory_space<vmem>>, %arg9: memref<1x128xf32, #tpu.memory_space<vmem>>, %arg10: memref<16x128xf32, #tpu.memory_space<vmem>>) attributes {dimension_semantics = [], scalar_prefetch = 0 : i64, scratch_operands = 0 : i64, tpu.core_type = #tpu.core_type<tc>} {
    %c0 = arith.constant 0 : index
    %c0_0 = arith.constant 0 : index
    %0 = vector.load %arg0[%c0, %c0_0] : memref<16x384xbf16, #tpu.memory_space<vmem>>, vector<16x384xbf16>
    %1 = tpu.iota {dimensions = array<i32: 1>} : vector<1x384xi32>
    %c0_1 = arith.constant 0 : index
    %c0_2 = arith.constant 0 : index
    %2 = vector.load %arg2[%c0_1, %c0_2] : memref<16x1xf32, #tpu.memory_space<vmem>>, vector<16x1xf32>
    %c128_i32 = arith.constant 128 : i32
    %3 = vector.broadcast %c128_i32 : i32 to vector<1x384xi32>
    %4 = arith.cmpi slt, %1, %3 : vector<1x384xi32>
    %c256_i32 = arith.constant 256 : i32
    %5 = vector.broadcast %c256_i32 : i32 to vector<1x384xi32>
    %6 = arith.cmpi slt, %1, %5 : vector<1x384xi32>
    %cst = arith.constant 0.000000e+00 : f32
    %7 = vector.shape_cast %6 : vector<1x384xi1> to vector<1x384xi1>
    %8 = vector.broadcast %7 : vector<1x384xi1> to vector<16x384xi1>
    %9 = vector.broadcast %cst : f32 to vector<16x384xf32>
    %10 = vector.shape_cast %2 : vector<16x1xf32> to vector<16x1xf32>
    %11 = vector.broadcast %10 : vector<16x1xf32> to vector<16x384xf32>
    %12 = arith.select %8, %9, %11 : vector<16x384xi1>, vector<16x384xf32>
    %cst_3 = arith.constant 1.000000e+00 : f32
    %13 = vector.shape_cast %4 : vector<1x384xi1> to vector<1x384xi1>
    %14 = vector.broadcast %13 : vector<1x384xi1> to vector<16x384xi1>
    %15 = vector.broadcast %cst_3 : f32 to vector<16x384xf32>
    %16 = arith.select %14, %15, %12 : vector<16x384xi1>, vector<16x384xf32>
    %17 = arith.truncf %16 : vector<16x384xf32> to vector<16x384xbf16>
    %18 = arith.mulf %0, %17 : vector<16x384xbf16>
    %19 = tpu.concatenate %18, %0 in 0 : vector<16x384xbf16>, vector<16x384xbf16> -> vector<32x384xbf16>
    %c0_4 = arith.constant 0 : index
    %c0_5 = arith.constant 0 : index
    %20 = vector.load %arg5[%c0_4, %c0_5] : memref<384x128xbf16, #tpu.memory_space<vmem>>, vector<384x128xbf16>
    %cst_6 = arith.constant dense<0.000000e+00> : vector<32x128xf32>
    %21 = tpu.matmul %19, %20, %cst_6 {dimension_numbers = #tpu.dot_dimension_numbers<[1], [0], [0], [1], [0, 0, 1, 1], [], []>} : vector<32x384xbf16>, vector<384x128xbf16>, vector<32x128xf32> -> vector<32x128xf32>
    %c0_7 = arith.constant 0 : index
    %c0_8 = arith.constant 0 : index
    %22 = vector.load %arg1[%c0_7, %c0_8] : memref<16x1xf32, #tpu.memory_space<vmem>>, vector<16x1xf32>
    %c0_9 = arith.constant 0 : index
    %c0_10 = arith.constant 0 : index
    %23 = vector.load %arg1[%c0_9, %c0_10] : memref<16x1xf32, #tpu.memory_space<vmem>>, vector<16x1xf32>
    %24 = tpu.concatenate %22, %23 in 0 : vector<16x1xf32>, vector<16x1xf32> -> vector<32x1xf32>
    %c0_11 = arith.constant 0 : index
    %c0_12 = arith.constant 0 : index
    %25 = vector.load %arg6[%c0_11, %c0_12] : memref<1x128xf32, #tpu.memory_space<vmem>>, vector<1x128xf32>
    %26 = vector.broadcast %24 : vector<32x1xf32> to vector<32x128xf32>
    %27 = vector.broadcast %25 : vector<1x128xf32> to vector<32x128xf32>
    %28 = arith.mulf %26, %27 : vector<32x128xf32>
    %c0_13 = arith.constant 0 : index
    %c0_14 = arith.constant 0 : index
    %29 = vector.load %arg7[%c0_13, %c0_14] : memref<1x128xf32, #tpu.memory_space<vmem>>, vector<1x128xf32>
    %30 = vector.broadcast %29 : vector<1x128xf32> to vector<32x128xf32>
    %31 = arith.addf %28, %30 : vector<32x128xf32>
    %32 = arith.addf %21, %31 : vector<32x128xf32>
    %33 = arith.negf %32 : vector<32x128xf32>
    %34 = math.exp %33 : vector<32x128xf32>
    %cst_15 = arith.constant 1.000000e+00 : f32
    %35 = vector.broadcast %cst_15 : f32 to vector<32x128xf32>
    %36 = arith.addf %35, %34 : vector<32x128xf32>
    %37 = arith.divf %35, %36 : vector<32x128xf32>
    %38 = arith.mulf %32, %37 : vector<32x128xf32>
    %39 = arith.truncf %38 : vector<32x128xf32> to vector<32x128xbf16>
    %c0_16 = arith.constant 0 : index
    %c0_17 = arith.constant 0 : index
    %40 = vector.load %arg8[%c0_16, %c0_17] : memref<128x128xbf16, #tpu.memory_space<vmem>>, vector<128x128xbf16>
    %cst_18 = arith.constant dense<0.000000e+00> : vector<32x128xf32>
    %41 = tpu.matmul %39, %40, %cst_18 {dimension_numbers = #tpu.dot_dimension_numbers<[1], [0], [0], [1], [0, 0, 1, 1], [], []>} : vector<32x128xbf16>, vector<128x128xbf16>, vector<32x128xf32> -> vector<32x128xf32>
    %c0_19 = arith.constant 0 : index
    %c0_20 = arith.constant 0 : index
    %42 = vector.load %arg9[%c0_19, %c0_20] : memref<1x128xf32, #tpu.memory_space<vmem>>, vector<1x128xf32>
    %43 = vector.broadcast %42 : vector<1x128xf32> to vector<32x128xf32>
    %44 = arith.addf %41, %43 : vector<32x128xf32>
    %45 = vector.extract_strided_slice %44 {offsets = [0, 0], sizes = [16, 128], strides = [1, 1]} : vector<32x128xf32> to vector<16x128xf32>
    %46 = vector.extract_strided_slice %44 {offsets = [16, 0], sizes = [16, 128], strides = [1, 1]} : vector<32x128xf32> to vector<16x128xf32>
    %c0_21 = arith.constant 0 : index
    %c0_22 = arith.constant 0 : index
    %47 = vector.load %arg3[%c0_21, %c0_22] : memref<16x1xf32, #tpu.memory_space<vmem>>, vector<16x1xf32>
    %48 = vector.broadcast %47 : vector<16x1xf32> to vector<16x128xf32>
    %49 = arith.mulf %48, %46 : vector<16x128xf32>
    %c0_23 = arith.constant 0 : index
    %c0_24 = arith.constant 0 : index
    %50 = vector.load %arg4[%c0_23, %c0_24] : memref<16x1xf32, #tpu.memory_space<vmem>>, vector<16x1xf32>
    %51 = vector.broadcast %50 : vector<16x1xf32> to vector<16x128xf32>
    %52 = arith.mulf %51, %45 : vector<16x128xf32>
    %53 = arith.subf %49, %52 : vector<16x128xf32>
    %c0_25 = arith.constant 0 : index
    %c0_26 = arith.constant 0 : index
    %54 = vector.load %arg10[%c0_25, %c0_26] : memref<16x128xf32, #tpu.memory_space<vmem>>, vector<16x128xf32>
    tpu.vector_store %arg10[%c0_25, %c0_26], %53 {strides = array<i32>} : memref<16x128xf32, #tpu.memory_space<vmem>>, vector<16x128xf32>,
    return
  }
}

</mosaic_0001>

<llo_original>
// kernel: _lambda_.1
$region0: #{_lambda_.1}
  #allocation0 [shape = 'u32[]', space=smem, size = 0x4, offset = 0x4, fixed_abs, tag = 'smem constant byte address 0x4 - core index']
  #allocation1 [shape = 'u32[144,128]{1,0:T(1,128)}', space=vmem, size = 0x12000, scoped, tag = 'internal scratch']
  %s0 = inlined_call_operand.vmem [shape: bf16[16,384], index: 0, kind: input, shape index: {}]
  %s1 = inlined_call_operand.vmem [shape: f32[16,1], index: 1, kind: input, shape index: {}]
  %s2 = inlined_call_operand.vmem [shape: f32[16,1], index: 2, kind: input, shape index: {}]
  %s3 = inlined_call_operand.vmem [shape: f32[16,1], index: 3, kind: input, shape index: {}]
  %s4 = inlined_call_operand.vmem [shape: f32[16,1], index: 4, kind: input, shape index: {}]
  %s5 = inlined_call_operand.vmem [shape: bf16[384,128], index: 5, kind: input, shape index: {}]
  %s6 = inlined_call_operand.vmem [shape: f32[1,128], index: 6, kind: input, shape index: {}]
  %s7 = inlined_call_operand.vmem [shape: f32[1,128], index: 7, kind: input, shape index: {}]
  %s8 = inlined_call_operand.vmem [shape: bf16[128,128], index: 8, kind: input, shape index: {}]
  %s9 = inlined_call_operand.vmem [shape: f32[1,128], index: 9, kind: input, shape index: {}]
  %s10 = inlined_call_operand.hbm [shape: f32[16,128], index: 10, kind: output, shape index: {}]
  %s11 = sld [smem:[#allocation0]]
  $region50: #{_lambda_.1} parent=0
    _
  %s13 = ssub.s32 1, %s11
  %s14 = scalar_select 0, %s13, %s11
  $region1: #{_lambda_.1} parent=0
    #allocation2 [shape = 'u8[8192]{0}', space=vmem, size = 0x2000, scoped, tag = 'output window, operand 0, single buffered']
    #allocation3 [shape = 's32[1]{0}', space=sflag, size = 0x4, scoped, tag = 'scoped memory for _lambda_.1']
    %15 = vsyncpa [#allocation3], 0
    // Predicated region
    $region2: #{_lambda_.1} parent=1 // pred_check
      _
    $region3: #{_lambda_.1} parent=1 // pred_check_branch
      %17 = sbr.rel (0) target = $region5
    $region4: #{_lambda_.1} parent=1 // pred_region
      _
    $region5: #{_lambda_.1} parent=1 // pred_fallthru
      _
    // Predicated region
    $region6: #{_lambda_.1} parent=1 // pred_check
      _
    $region7: #{_lambda_.1} parent=1 // pred_check_branch
      %19 = sbr.rel (0) target = $region9
    $region8: #{_lambda_.1} parent=1 // pred_region
      _
    $region9: #{_lambda_.1} parent=1 // pred_fallthru
      _
    // Predicated region
    $region10: #{_lambda_.1} parent=1 // pred_check
      _
    $region11: #{_lambda_.1} parent=1 // pred_check_branch
      %21 = sbr.rel (0) target = $region13
    $region12: #{_lambda_.1} parent=1 // pred_region
      _
    $region13: #{_lambda_.1} parent=1 // pred_fallthru
      _
    // Predicated region
    $region14: #{_lambda_.1} parent=1 // pred_check
      _
    $region15: #{_lambda_.1} parent=1 // pred_check_branch
      %23 = sbr.rel (0) target = $region17
    $region16: #{_lambda_.1} parent=1 // pred_region
      _
    $region17: #{_lambda_.1} parent=1 // pred_fallthru
      _
    // Predicated region
    $region18: #{_lambda_.1} parent=1 // pred_check
      _
    $region19: #{_lambda_.1} parent=1 // pred_check_branch
      %25 = sbr.rel (0) target = $region21
    $region20: #{_lambda_.1} parent=1 // pred_region
      _
    $region21: #{_lambda_.1} parent=1 // pred_fallthru
      _
    // Predicated region
    $region22: #{_lambda_.1} parent=1 // pred_check
      _
    $region23: #{_lambda_.1} parent=1 // pred_check_branch
      %27 = sbr.rel (0) target = $region25
    $region24: #{_lambda_.1} parent=1 // pred_region
      _
    $region25: #{_lambda_.1} parent=1 // pred_fallthru
      _
    // Predicated region
    $region26: #{_lambda_.1} parent=1 // pred_check
      _
    $region27: #{_lambda_.1} parent=1 // pred_check_branch
      %29 = sbr.rel (0) target = $region29
    $region28: #{_lambda_.1} parent=1 // pred_region
      _
    $region29: #{_lambda_.1} parent=1 // pred_fallthru
      _
    // Predicated region
    $region30: #{_lambda_.1} parent=1 // pred_check
      _
    $region31: #{_lambda_.1} parent=1 // pred_check_branch
      %31 = sbr.rel (0) target = $region33
    $region32: #{_lambda_.1} parent=1 // pred_region
      _
    $region33: #{_lambda_.1} parent=1 // pred_fallthru
      _
    // Predicated region
    $region34: #{_lambda_.1} parent=1 // pred_check
      _
    $region35: #{_lambda_.1} parent=1 // pred_check_branch
      %33 = sbr.rel (0) target = $region37
    $region36: #{_lambda_.1} parent=1 // pred_region
      _
    $region37: #{_lambda_.1} parent=1 // pred_fallthru
      _
    // Predicated region
    $region38: #{_lambda_.1} parent=1 // pred_check
      _
    $region39: #{_lambda_.1} parent=1 // pred_check_branch
      %35 = sbr.rel (0) target = $region41
    $region40: #{_lambda_.1} parent=1 // pred_region
      _
    $region41: #{_lambda_.1} parent=1 // pred_fallthru
      _
    %v37 = vld [vmem:[%s0] sm:$0xff]
    %v38 = vld [vmem:[%s0 + $0x8] sm:$0xf]
    %v39 = vld [vmem:[%s0 + $0xc] sm:$0xff]
    %v40 = vld [vmem:[%s0 + $0x14] sm:$0xf]
    %v41 = vlaneseq
    %v42 = vand.u32 %v41, 127
    %v43 = vadd.s32 %v42, 128
    %v44 = vadd.s32 %v42, 256
    %v45 = vld [vmem:[%s2] sm:$0xff]
    %v46 = vld [vmem:[%s2 + $0x8] sm:$0xff]
    %vm47 = vcmp.lt.s32.totalorder %v42, 128
    %vm48 = vcmp.lt.s32.totalorder %v43, 128
    %vm49 = vcmp.lt.s32.totalorder %v44, 128
    %vm50 = vcmp.lt.s32.totalorder %v42, 256
    %vm51 = vcmp.lt.s32.totalorder %v43, 256
    %vm52 = vcmp.lt.s32.totalorder %v44, 256
    %v53 = vsel %vm50, 1, 0
    %v54 = vsel %vm51, 1, 0
    %v55 = vsel %vm52, 1, 0
    %vm56 = vcmp.eq.s32.totalorder %v53, 1
    %vm57 = vcmp.eq.s32.totalorder %v54, 1
    %vm58 = vcmp.eq.s32.totalorder %v55, 1
    %60 = vset.pattern.permute.xlu0 0
    %61 = vperm.xlu0 %60, %v45
    %v62 = vpop.permute.xlu0 %61
    %65 = vset.pattern.permute.xlu0 0
    %66 = vperm.xlu0 %65, %v46
    %v67 = vpop.permute.xlu0 %66
    %v69 = vsel %vm56, 0.0, %v62
    %v70 = vsel %vm57, 0.0, %v62
    %v71 = vsel %vm58, 0.0, %v62
    %v72 = vsel %vm56, 0.0, %v67
    %v73 = vsel %vm57, 0.0, %v67
    %v74 = vsel %vm58, 0.0, %v67
    %v75 = vsel %vm47, 1, 0
    %v76 = vsel %vm48, 1, 0
    %v77 = vsel %vm49, 1, 0
    %vm78 = vcmp.eq.s32.totalorder %v75, 1
    %vm79 = vcmp.eq.s32.totalorder %v76, 1
    %vm80 = vcmp.eq.s32.totalorder %v77, 1
    %v81 = vsel %vm78, 1.0, %v69
    %v82 = vsel %vm79, 1.0, %v70
    %v83 = vsel %vm80, 1.0, %v71
    %v84 = vsel %vm78, 1.0, %v72
    %v85 = vsel %vm79, 1.0, %v73
    %v86 = vsel %vm80, 1.0, %v74
    %v87 = vpack.c.bf16 %v84, %v81
    %v88 = vpack.c.bf16 %v85, %v82
    %v89 = vpack.c.bf16 %v86, %v83
    %v93 = vunpack.c.l.b16 %v87
    %v94 = vunpack.c.l.b16 %v88
    %v95 = vunpack.c.l.b16 %v89
    %v96 = vunpack.c.h.b16 %v87
    %v97 = vunpack.c.h.b16 %v88
    %v98 = vunpack.c.h.b16 %v89
    %v99 = vpack.c.b16 %v94, %v93
    %v100 = vpack.c.b16 %v95, %v95
    %v101 = vpack.c.b16 %v97, %v96
    %v102 = vpack.c.b16 %v98, %v98
    %v107 = vmul.bf16 %v37, %v99
    %v108 = vmul.bf16 %v38, %v100
    %v109 = vmul.bf16 %v39, %v101
    %v110 = vmul.bf16 %v40, %v102
    %v115 = vunpack.c.l.b16 %v107
    %v116 = vunpack.c.h.b16 %v107
    %v117 = vunpack.c.l.b16 %v108
    %v118 = vunpack.c.l.b16 %v109
    %v119 = vunpack.c.h.b16 %v109
    %v120 = vunpack.c.l.b16 %v110
    %v121 = vpack.c.b16 %v118, %v115
    %v122 = vpack.c.b16 %v119, %v116
    %v123 = vpack.c.b16 %v120, %v117
    %v131 = vunpack.c.l.b16 %v37
    %v132 = vunpack.c.h.b16 %v37
    %v133 = vunpack.c.l.b16 %v38
    %v134 = vunpack.c.l.b16 %v39
    %v135 = vunpack.c.h.b16 %v39
    %v136 = vunpack.c.l.b16 %v40
    %v137 = vpack.c.b16 %v134, %v131
    %v138 = vpack.c.b16 %v135, %v132
    %v139 = vpack.c.b16 %v136, %v133
    %v143 = vld [vmem:[%s5] sm:$0xf]
    %v144 = vld [vmem:[%s5 + $0x4] sm:$0xf]
    %v145 = vld [vmem:[%s5 + $0x8] sm:$0xf]
    %v146 = vld [vmem:[%s5 + $0xc] sm:$0xf]
    %v147 = vld [vmem:[%s5 + $0x10] sm:$0xf]
    %v148 = vld [vmem:[%s5 + $0x14] sm:$0xf]
    %v149 = vld [vmem:[%s5 + $0x18] sm:$0xf]
    %v150 = vld [vmem:[%s5 + $0x1c] sm:$0xf]
    %v151 = vld [vmem:[%s5 + $0x20] sm:$0xf]
    %v152 = vld [vmem:[%s5 + $0x24] sm:$0xf]
    %v153 = vld [vmem:[%s5 + $0x28] sm:$0xf]
    %v154 = vld [vmem:[%s5 + $0x2c] sm:$0xf]
    %v155 = vld [vmem:[%s5 + $0x30] sm:$0xf]
    %v156 = vld [vmem:[%s5 + $0x34] sm:$0xf]
    %v157 = vld [vmem:[%s5 + $0x38] sm:$0xf]
    %v158 = vld [vmem:[%s5 + $0x3c] sm:$0xf]
    %v159 = vld [vmem:[%s5 + $0x40] sm:$0xf]
    %v160 = vld [vmem:[%s5 + $0x44] sm:$0xf]
    %v161 = vld [vmem:[%s5 + $0x48] sm:$0xf]
    %v162 = vld [vmem:[%s5 + $0x4c] sm:$0xf]
    %v163 = vld [vmem:[%s5 + $0x50] sm:$0xf]
    %v164 = vld [vmem:[%s5 + $0x54] sm:$0xf]
    %v165 = vld [vmem:[%s5 + $0x58] sm:$0xf]
    %v166 = vld [vmem:[%s5 + $0x5c] sm:$0xf]
    %v167 = vld [vmem:[%s5 + $0x60] sm:$0xf]
    %v168 = vld [vmem:[%s5 + $0x64] sm:$0xf]
    %v169 = vld [vmem:[%s5 + $0x68] sm:$0xf]
    %v170 = vld [vmem:[%s5 + $0x6c] sm:$0xf]
    %v171 = vld [vmem:[%s5 + $0x70] sm:$0xf]
    %v172 = vld [vmem:[%s5 + $0x74] sm:$0xf]
    %v173 = vld [vmem:[%s5 + $0x78] sm:$0xf]
    %v174 = vld [vmem:[%s5 + $0x7c] sm:$0xf]
    %v175 = vld [vmem:[%s5 + $0x80] sm:$0xf]
    %v176 = vld [vmem:[%s5 + $0x84] sm:$0xf]
    %v177 = vld [vmem:[%s5 + $0x88] sm:$0xf]
    %v178 = vld [vmem:[%s5 + $0x8c] sm:$0xf]
    %v179 = vld [vmem:[%s5 + $0x90] sm:$0xf]
    %v180 = vld [vmem:[%s5 + $0x94] sm:$0xf]
    %v181 = vld [vmem:[%s5 + $0x98] sm:$0xf]
    %v182 = vld [vmem:[%s5 + $0x9c] sm:$0xf]
    %v183 = vld [vmem:[%s5 + $0xa0] sm:$0xf]
    %v184 = vld [vmem:[%s5 + $0xa4] sm:$0xf]
    %v185 = vld [vmem:[%s5 + $0xa8] sm:$0xf]
    %v186 = vld [vmem:[%s5 + $0xac] sm:$0xf]
    %v187 = vld [vmem:[%s5 + $0xb0] sm:$0xf]
    %v188 = vld [vmem:[%s5 + $0xb4] sm:$0xf]
    %v189 = vld [vmem:[%s5 + $0xb8] sm:$0xf]
    %v190 = vld [vmem:[%s5 + $0xbc] sm:$0xf]
    %v191 = vld [vmem:[%s1] sm:$0xff]
    %v192 = vld [vmem:[%s1 + $0x8] sm:$0xff]
    %v193 = vld [vmem:[%s6] sm:$0x1]
    %195 = vset.pattern.permute.xlu0 0
    %196 = vperm.xlu0 %195, %v191
    %v197 = vpop.permute.xlu0 %196
    %200 = vset.pattern.permute.xlu0 0
    %201 = vperm.xlu0 %200, %v192
    %v202 = vpop.permute.xlu0 %201
    %v205 = vlaneseq
    %v206 = vshrl.u32 %v205, 7
    %v207 = vsub.s32 0, %v206
    %v208 = vrot.slane %v193, %v207
    %v210 = vmul.f32 %v197, %v208
    %v211 = vmul.f32 %v202, %v208
    %v212 = vld [vmem:[%s7] sm:$0x1]
    %v214 = vlaneseq
    %v215 = vshrl.u32 %v214, 7
    %v216 = vsub.s32 0, %v215
    %v217 = vrot.slane %v212, %v216
    %v219 = vadd.f32 %v210, %v217
    %v220 = vadd.f32 %v211, %v217
    %v269 = vunpack.c.l.b16 %v143
    %v270 = vunpack.c.l.b16 %v144
    %v271 = vunpack.c.l.b16 %v145
    %v272 = vunpack.c.l.b16 %v146
    %v273 = vunpack.c.l.b16 %v147
    %v274 = vunpack.c.l.b16 %v148
    %v275 = vunpack.c.l.b16 %v149
    %v276 = vunpack.c.l.b16 %v150
    %v277 = vunpack.c.l.b16 %v151
    %v278 = vunpack.c.l.b16 %v152
    %v279 = vunpack.c.l.b16 %v153
    %v280 = vunpack.c.l.b16 %v154
    %v281 = vunpack.c.l.b16 %v155
    %v282 = vunpack.c.l.b16 %v156
    %v283 = vunpack.c.l.b16 %v157
    %v284 = vunpack.c.l.b16 %v158
    %v285 = vunpack.c.l.b16 %v159
    %v286 = vunpack.c.l.b16 %v160
    %v287 = vunpack.c.l.b16 %v161
    %v288 = vunpack.c.l.b16 %v162
    %v289 = vunpack.c.l.b16 %v163
    %v290 = vunpack.c.l.b16 %v164
    %v291 = vunpack.c.l.b16 %v165
    %v292 = vunpack.c.l.b16 %v166
    %v293 = vunpack.c.l.b16 %v167
    %v294 = vunpack.c.l.b16 %v168
    %v295 = vunpack.c.l.b16 %v169
    %v296 = vunpack.c.l.b16 %v170
    %v297 = vunpack.c.l.b16 %v171
    %v298 = vunpack.c.l.b16 %v172
    %v299 = vunpack.c.l.b16 %v173
    %v300 = vunpack.c.l.b16 %v174
    %v301 = vunpack.c.l.b16 %v175
    %v302 = vunpack.c.l.b16 %v176
    %v303 = vunpack.c.l.b16 %v177
    %v304 = vunpack.c.l.b16 %v178
    %v305 = vunpack.c.l.b16 %v179
    %v306 = vunpack.c.l.b16 %v180
    %v307 = vunpack.c.l.b16 %v181
    %v308 = vunpack.c.l.b16 %v182
    %v309 = vunpack.c.l.b16 %v183
    %v310 = vunpack.c.l.b16 %v184
    %v311 = vunpack.c.l.b16 %v185
    %v312 = vunpack.c.l.b16 %v186
    %v313 = vunpack.c.l.b16 %v187
    %v314 = vunpack.c.l.b16 %v188
    %v315 = vunpack.c.l.b16 %v189
    %v316 = vunpack.c.l.b16 %v190
    %v317 = vpack.c.b16 %v270, %v269
    %v318 = vpack.c.b16 %v272, %v271
    %v319 = vpack.c.b16 %v274, %v273
    %v320 = vpack.c.b16 %v276, %v275
    %v321 = vpack.c.b16 %v278, %v277
    %v322 = vpack.c.b16 %v280, %v279
    %v323 = vpack.c.b16 %v282, %v281
    %v324 = vpack.c.b16 %v284, %v283
    %v325 = vpack.c.b16 %v286, %v285
    %v326 = vpack.c.b16 %v288, %v287
    %v327 = vpack.c.b16 %v290, %v289
    %v328 = vpack.c.b16 %v292, %v291
    %v329 = vpack.c.b16 %v294, %v293
    %v330 = vpack.c.b16 %v296, %v295
    %v331 = vpack.c.b16 %v298, %v297
    %v332 = vpack.c.b16 %v300, %v299
    %v333 = vpack.c.b16 %v302, %v301
    %v334 = vpack.c.b16 %v304, %v303
    %v335 = vpack.c.b16 %v306, %v305
    %v336 = vpack.c.b16 %v308, %v307
    %v337 = vpack.c.b16 %v310, %v309
    %v338 = vpack.c.b16 %v312, %v311
    %v339 = vpack.c.b16 %v314, %v313
    %v340 = vpack.c.b16 %v316, %v315
    %365 = vmatprep.subr.bf16.mxu0 0
    %366 = vmatpush1.bf16.msra.mxu0 %v317
    %367 = vmatprep.subr.bf16.mxu0 0
    %368 = vmatpush1.bf16.msra.mxu0 %v318
    %369 = vmatprep.subr.bf16.mxu0 0
    %370 = vmatpush1.bf16.msra.mxu0 %v319
    %371 = vmatprep.subr.bf16.mxu0 0
    %372 = vmatpush1.bf16.msra.mxu0 %v320
    %373 = vmatprep.subr.bf16.mxu0 0
    %374 = vmatpush1.bf16.msra.mxu0 %v321
    %375 = vmatprep.subr.bf16.mxu0 0
    %376 = vmatpush1.bf16.msra.mxu0 %v322
    %377 = vmatprep.subr.bf16.mxu0 0
    %378 = vmatpush1.bf16.msra.mxu0 %v323
    %379 = vmatprep.subr.bf16.mxu0 0
    %380 = vmatpush1.bf16.msra.mxu0 %v324
    %381 = vmatprep.subr.bf16.mxu0 0
    %382 = vmatpush1.bf16.msra.mxu0 %v325
    %383 = vmatprep.subr.bf16.mxu0 0
    %384 = vmatpush1.bf16.msra.mxu0 %v326
    %385 = vmatprep.subr.bf16.mxu0 0
    %386 = vmatpush1.bf16.msra.mxu0 %v327
    %387 = vmatprep.subr.bf16.mxu0 0
    %388 = vmatpush1.bf16.msra.mxu0 %v328
    %389 = vmatprep.subr.bf16.mxu0 0
    %390 = vmatpush1.bf16.msra.mxu0 %v329
    %391 = vmatprep.subr.bf16.mxu0 0
    %392 = vmatpush1.bf16.msra.mxu0 %v330
    %393 = vmatprep.subr.bf16.mxu0 0
    %394 = vmatpush1.bf16.msra.mxu0 %v331
    %395 = vmatprep.subr.bf16.mxu0 0
    %396 = vmatpush1.bf16.msra.mxu0 %v332
    %397 = vmatprep.mubr.bf16.mxu0 %v122
    %398 = vmatmul.mubr.bf16.gmra.mrb[0].mxu0 %v121
    %v399 = vpop.f32.mrb[0].mxu0
    %v400 = vadd.f32 %v219, %v399
    %v401 = vpop.f32.mrb[0].mxu0
    %v402 = vpop.f32.mrb[0].mxu0
    %v403 = vadd.f32 %v220, %v402
    %v404 = vpop.f32.mrb[0].mxu0
    %405 = vmatprep.mubr.bf16.mxu0 %v138
    %406 = vmatmul.mubr.bf16.gmra.mrb[0].mxu0 %v137
    %v407 = vpop.f32.mrb[0].mxu0
    %v408 = vadd.f32 %v219, %v407
    %v409 = vpop.f32.mrb[0].mxu0
    %v410 = vpop.f32.mrb[0].mxu0
    %v411 = vadd.f32 %v220, %v410
    %v412 = vpop.f32.mrb[0].mxu0
    %413 = vdwg.mxu0
    %414 = vmatprep.subr.bf16.mxu0 0
    %415 = vmatpush1.bf16.msra.mxu0 %v333
    %416 = vmatprep.subr.bf16.mxu0 0
    %417 = vmatpush1.bf16.msra.mxu0 %v334
    %418 = vmatprep.subr.bf16.mxu0 0
    %419 = vmatpush1.bf16.msra.mxu0 %v335
    %420 = vmatprep.subr.bf16.mxu0 0
    %421 = vmatpush1.bf16.msra.mxu0 %v336
    %422 = vmatprep.subr.bf16.mxu0 0
    %423 = vmatpush1.bf16.msra.mxu0 %v337
    %424 = vmatprep.subr.bf16.mxu0 0
    %425 = vmatpush1.bf16.msra.mxu0 %v338
    %426 = vmatprep.subr.bf16.mxu0 0
    %427 = vmatpush1.bf16.msra.mxu0 %v339
    %428 = vmatprep.subr.bf16.mxu0 0
    %429 = vmatpush1.bf16.msra.mxu0 %v340
    %430 = vmatprep.subr.bf16.mxu0 0
    %431 = vmatpush1.bf16.msra.mxu0 0
    %432 = vmatprep.subr.bf16.mxu0 0
    %433 = vmatpush1.bf16.msra.mxu0 0
    %434 = vmatprep.subr.bf16.mxu0 0
    %435 = vmatpush1.bf16.msra.mxu0 0
    %436 = vmatprep.subr.bf16.mxu0 0
    %437 = vmatpush1.bf16.msra.mxu0 0
    %438 = vmatprep.subr.bf16.mxu0 0
    %439 = vmatpush1.bf16.msra.mxu0 0
    %440 = vmatprep.subr.bf16.mxu0 0
    %441 = vmatpush1.bf16.msra.mxu0 0
    %442 = vmatprep.subr.bf16.mxu0 0
    %443 = vmatpush1.bf16.msra.mxu0 0
    %444 = vmatprep.subr.bf16.mxu0 0
    %445 = vmatpush1.bf16.msra.mxu0 0
    %446 = vmatprep.mubr.bf16.mxu0 0
    %447 = vmatmul.mubr.bf16.gmra.mrb[0].mxu0 %v123
    %v448 = vpop.f32.mrb[0].mxu0
    %v449 = vadd.f32 %v400, %v448
    %v450 = vpop.f32.mrb[0].mxu0
    %v451 = vpop.f32.mrb[0].mxu0
    %v452 = vadd.f32 %v403, %v451
    %v453 = vpop.f32.mrb[0].mxu0
    %454 = vmatprep.mubr.bf16.mxu0 0
    %455 = vmatmul.mubr.bf16.gmra.mrb[0].mxu0 %v139
    %v456 = vpop.f32.mrb[0].mxu0
    %v457 = vadd.f32 %v408, %v456
    %v458 = vpop.f32.mrb[0].mxu0
    %v459 = vpop.f32.mrb[0].mxu0
    %v460 = vadd.f32 %v411, %v459
    %v461 = vpop.f32.mrb[0].mxu0
    %462 = vdwg.mxu0
    %v463 = vxor.u32 %v449, 2147483648
    %v464 = vxor.u32 %v452, 2147483648
    %v465 = vxor.u32 %v457, 2147483648
    %v466 = vxor.u32 %v460, 2147483648
    %v467 = vmul.f32 %v463, 1.442695
    %v468 = vpow.pop %v467
    %v469 = vmul.f32 %v464, 1.442695
    %v470 = vpow.pop %v469
    %v471 = vmul.f32 %v465, 1.442695
    %v472 = vpow.pop %v471
    %v473 = vmul.f32 %v466, 1.442695
    %v474 = vpow.pop %v473
    %v475 = vadd.f32 %v468, 1.0
    %v476 = vadd.f32 %v470, 1.0
    %v477 = vadd.f32 %v472, 1.0
    %v478 = vadd.f32 %v474, 1.0
    %v479 = vrcp.pop %v475
    %v480 = vmul.f32 1.0, %v479
    %v481 = vrcp.pop %v476
    %v482 = vmul.f32 1.0, %v481
    %v483 = vrcp.pop %v477
    %v484 = vmul.f32 1.0, %v483
    %v485 = vrcp.pop %v478
    %v486 = vmul.f32 1.0, %v485
    %v487 = vmul.f32 %v449, %v480
    %v488 = vmul.f32 %v452, %v482
    %v489 = vmul.f32 %v457, %v484
    %v490 = vmul.f32 %v460, %v486
    %v491 = vpack.c.bf16 %v488, %v487
    %v492 = vpack.c.bf16 %v490, %v489
    %v493 = vld [vmem:[%s8] sm:$0xf]
    %v494 = vld [vmem:[%s8 + $0x4] sm:$0xf]
    %v495 = vld [vmem:[%s8 + $0x8] sm:$0xf]
    %v496 = vld [vmem:[%s8 + $0xc] sm:$0xf]
    %v497 = vld [vmem:[%s8 + $0x10] sm:$0xf]
    %v498 = vld [vmem:[%s8 + $0x14] sm:$0xf]
    %v499 = vld [vmem:[%s8 + $0x18] sm:$0xf]
    %v500 = vld [vmem:[%s8 + $0x1c] sm:$0xf]
    %v501 = vld [vmem:[%s8 + $0x20] sm:$0xf]
    %v502 = vld [vmem:[%s8 + $0x24] sm:$0xf]
    %v503 = vld [vmem:[%s8 + $0x28] sm:$0xf]
    %v504 = vld [vmem:[%s8 + $0x2c] sm:$0xf]
    %v505 = vld [vmem:[%s8 + $0x30] sm:$0xf]
    %v506 = vld [vmem:[%s8 + $0x34] sm:$0xf]
    %v507 = vld [vmem:[%s8 + $0x38] sm:$0xf]
    %v508 = vld [vmem:[%s8 + $0x3c] sm:$0xf]
    %v509 = vld [vmem:[%s9] sm:$0x1]
    %v511 = vlaneseq
    %v512 = vshrl.u32 %v511, 7
    %v513 = vsub.s32 0, %v512
    %v514 = vrot.slane %v509, %v513
    %v532 = vunpack.c.l.b16 %v493
    %v533 = vunpack.c.l.b16 %v494
    %v534 = vunpack.c.l.b16 %v495
    %v535 = vunpack.c.l.b16 %v496
    %v536 = vunpack.c.l.b16 %v497
    %v537 = vunpack.c.l.b16 %v498
    %v538 = vunpack.c.l.b16 %v499
    %v539 = vunpack.c.l.b16 %v500
    %v540 = vunpack.c.l.b16 %v501
    %v541 = vunpack.c.l.b16 %v502
    %v542 = vunpack.c.l.b16 %v503
    %v543 = vunpack.c.l.b16 %v504
    %v544 = vunpack.c.l.b16 %v505
    %v545 = vunpack.c.l.b16 %v506
    %v546 = vunpack.c.l.b16 %v507
    %v547 = vunpack.c.l.b16 %v508
    %v548 = vpack.c.b16 %v533, %v532
    %v549 = vpack.c.b16 %v535, %v534
    %v550 = vpack.c.b16 %v537, %v536
    %v551 = vpack.c.b16 %v539, %v538
    %v552 = vpack.c.b16 %v541, %v540
    %v553 = vpack.c.b16 %v543, %v542
    %v554 = vpack.c.b16 %v545, %v544
    %v555 = vpack.c.b16 %v547, %v546
    %564 = vmatprep.subr.bf16.mxu0 0
    %565 = vmatpush1.bf16.msra.mxu0 %v548
    %566 = vmatprep.subr.bf16.mxu0 0
    %567 = vmatpush1.bf16.msra.mxu0 %v549
    %568 = vmatprep.subr.bf16.mxu0 0
    %569 = vmatpush1.bf16.msra.mxu0 %v550
    %570 = vmatprep.subr.bf16.mxu0 0
    %571 = vmatpush1.bf16.msra.mxu0 %v551
    %572 = vmatprep.subr.bf16.mxu0 0
    %573 = vmatpush1.bf16.msra.mxu0 %v552
    %574 = vmatprep.subr.bf16.mxu0 0
    %575 = vmatpush1.bf16.msra.mxu0 %v553
    %576 = vmatprep.subr.bf16.mxu0 0
    %577 = vmatpush1.bf16.msra.mxu0 %v554
    %578 = vmatprep.subr.bf16.mxu0 0
    %579 = vmatpush1.bf16.msra.mxu0 %v555
    %580 = vmatprep.subr.bf16.mxu0 0
    %581 = vmatpush1.bf16.msra.mxu0 0
    %582 = vmatprep.subr.bf16.mxu0 0
    %583 = vmatpush1.bf16.msra.mxu0 0
    %584 = vmatprep.subr.bf16.mxu0 0
    %585 = vmatpush1.bf16.msra.mxu0 0
    %586 = vmatprep.subr.bf16.mxu0 0
    %587 = vmatpush1.bf16.msra.mxu0 0
    %588 = vmatprep.subr.bf16.mxu0 0
    %589 = vmatpush1.bf16.msra.mxu0 0
    %590 = vmatprep.subr.bf16.mxu0 0
    %591 = vmatpush1.bf16.msra.mxu0 0
    %592 = vmatprep.subr.bf16.mxu0 0
    %593 = vmatpush1.bf16.msra.mxu0 0
    %594 = vmatprep.subr.bf16.mxu0 0
    %595 = vmatpush1.bf16.msra.mxu0 0
    %596 = vmatprep.mubr.bf16.mxu0 0
    %597 = vmatmul.mubr.bf16.gmra.mrb[0].mxu0 %v491
    %v598 = vpop.f32.mrb[0].mxu0
    %v599 = vadd.f32 %v514, %v598
    %v600 = vpop.f32.mrb[0].mxu0
    %v601 = vpop.f32.mrb[0].mxu0
    %v602 = vadd.f32 %v514, %v601
    %v603 = vpop.f32.mrb[0].mxu0
    %604 = vmatprep.mubr.bf16.mxu0 0
    %605 = vmatmul.mubr.bf16.gmra.mrb[0].mxu0 %v492
    %v606 = vpop.f32.mrb[0].mxu0
    %v607 = vadd.f32 %v514, %v606
    %v608 = vpop.f32.mrb[0].mxu0
    %v609 = vpop.f32.mrb[0].mxu0
    %v610 = vadd.f32 %v514, %v609
    %v611 = vpop.f32.mrb[0].mxu0
    %612 = vdwg.mxu0
    %v613 = vld [vmem:[%s3] sm:$0xff]
    %v614 = vld [vmem:[%s3 + $0x8] sm:$0xff]
    %616 = vset.pattern.permute.xlu0 0
    %617 = vperm.xlu0 %616, %v613
    %v618 = vpop.permute.xlu0 %617
    %621 = vset.pattern.permute.xlu0 0
    %622 = vperm.xlu0 %621, %v614
    %v623 = vpop.permute.xlu0 %622
    %v625 = vmul.f32 %v618, %v607
    %v626 = vmul.f32 %v623, %v610
    %v627 = vld [vmem:[%s4] sm:$0xff]
    %v628 = vld [vmem:[%s4 + $0x8] sm:$0xff]
    %630 = vset.pattern.permute.xlu0 0
    %631 = vperm.xlu0 %630, %v627
    %v632 = vpop.permute.xlu0 %631
    %635 = vset.pattern.permute.xlu0 0
    %636 = vperm.xlu0 %635, %v628
    %v637 = vpop.permute.xlu0 %636
    %v639 = vmul.f32 %v632, %v599
    %v640 = vmul.f32 %v637, %v602
    %v641 = vsub.f32 %v625, %v639
    %v642 = vsub.f32 %v626, %v640
    %643 = vst [vmem:[#allocation2] sm:$0xff] %v641
    %644 = vst [vmem:[#allocation2 + $0x8] sm:$0xff] %v642
    // Predicated region
    $region42: #{_lambda_.1} parent=1 // pred_check
      _
    $region43: #{_lambda_.1} parent=1 // pred_check_branch
      %646 = sbr.rel (0) target = $region45
    $region44: #{_lambda_.1} parent=1 // pred_region
      %s648 = ssub.s32 256, 256
      %649 = vsyncadd [#allocation3], %s648
      %s650 = sshll.u32 [#allocation2], 4
      %s651 = int_to_ptr.vmem [resolvable:$true] %s650
      %656 = dma.vmem_to_hbm [thread:$0]  %s651, 256, %s10, [#allocation3], 128, 128, 8
    $region45: #{_lambda_.1} parent=1 // pred_fallthru
      _
    // Predicated region
    $region46: #{_lambda_.1} parent=1 // pred_check
      _
    $region47: #{_lambda_.1} parent=1 // pred_check_branch
      %658 = sbr.rel (0) target = $region49
    $region48: #{_lambda_.1} parent=1 // pred_region
      %659 = dma.done [#allocation3], 256
    $region49: #{_lambda_.1} parent=1 // pred_fallthru
      _
    %660 = vsyncpa [#allocation3], 1

</llo_original>
